<compile_context>
chip_gen: v7x
topology: tpu7x:2x2x1
jax: 0.10.0
libtpu: 0.0.40
codegen_flags: <defaults>
</compile_context>

<pallas_src>
import numpy as np
import jax
import jax.numpy as jnp
from jax.experimental import pallas as pl
from jax.experimental.pallas import tpu as pltpu


# ----------------------------- module configuration ----------------------------- #
INITIAL_DIM = 64          # initialDimension
EMBEDDED_DIM = 16         # embeddedDim
EMBEDDING_STRIDE = 8      # embeddingStride
COMPRESSED_DIM = 32       # compressedDim
COMPRESSED_EMB_DIM = 8    # compressedEmbeddedDim
BATCH = 8

# signalEmbedding_indexSlices = arange(0, initialDim - embeddedDim + 1, stride)
SIGNAL_STARTS = np.arange(0, INITIAL_DIM - EMBEDDED_DIM + 1, EMBEDDING_STRIDE,
                          dtype=np.int64)
NUM_SEGMENTS = len(SIGNAL_STARTS)
# compressedEmbedding_indexSlices = linspace(0, compDim - compEmbDim, nSeg).long()
COMPRESSED_STARTS = np.linspace(0, COMPRESSED_DIM - COMPRESSED_EMB_DIM,
                                NUM_SEGMENTS).astype(np.int64)


def _assert_valid_embedding(initial_dim, embedded_dim, starts):
    diffs = np.diff(starts)
    assert diffs[0] <= embedded_dim, (starts, embedded_dim)
    assert starts[-1] == initial_dim - embedded_dim, starts
    assert len(np.unique(diffs)) == 1, starts
    assert starts[0] == 0, starts


assert len(SIGNAL_STARTS) == len(COMPRESSED_STARTS)
assert len(SIGNAL_STARTS) - 1 <= COMPRESSED_DIM - COMPRESSED_EMB_DIM
_assert_valid_embedding(INITIAL_DIM, EMBEDDED_DIM, SIGNAL_STARTS)
_assert_valid_embedding(COMPRESSED_DIM, COMPRESSED_EMB_DIM, COMPRESSED_STARTS)


# ------------------------- constant gather / scatter maps ------------------------ #
# gather: initial position d -> (segment i, intra-segment position k)
_G3 = np.zeros((INITIAL_DIM, NUM_SEGMENTS, EMBEDDED_DIM), np.float32)
for _i, _s in enumerate(SIGNAL_STARTS):
    for _k in range(EMBEDDED_DIM):
        _G3[_s + _k, _i, _k] = 1.0
# scatter: (segment i, compressed-embedded position m) -> compressed position c
_S3 = np.zeros((NUM_SEGMENTS, COMPRESSED_EMB_DIM, COMPRESSED_DIM), np.float32)
for _i, _s in enumerate(COMPRESSED_STARTS):
    for _k in range(COMPRESSED_EMB_DIM):
        _S3[_i, _k, _s + _k] = 1.0
_CONTRIB = _S3.sum(axis=(0, 1))                     # (COMPRESSED_DIM,)
# Every compressed position is covered in this config (reference would produce
# NaN via 0/0 otherwise); guard so a future config change fails loudly.
assert np.all(_CONTRIB > 0), "uncovered compressed positions -> division by zero"
_INV_CONTRIB = (1.0 / _CONTRIB).astype(np.float32)


# --------------------------------- tiling config --------------------------------- #
MAX_TILE_ROWS = 16384          # batch rows per grid step: 4 MiB in + 2 MiB out per
                               # block, ~12 MiB double-buffered -> fits the explicit
                               # 32 MiB VMEM limit on v5e/v6e/v7x.
MIN_ROWS_FOR_TC_SPLIT = 2048   # enough work to split across v7x's two TensorCores
SMALL_BATCH_FALLBACK = 1024    # below this, plain XLA beats the pallas_call fixed cost
VMEM_LIMIT_BYTES = 32 * 1024 * 1024


# --------------------------------- Pallas kernel --------------------------------- #
def conv_linear_kernel(x_ref, w_ref, b_ref, o_ref):
    """One batch tile of the fully-fused forward pass.

    x_ref : (TB, 64)  f32   natural-layout input rows
    w_ref : (64, 32)  f32   fused gather @ Linear @ scatter @ diag(1/contrib)
    b_ref : (1, 32)   f32   fused bias
    o_ref : (TB, 32)  f32   compressed output rows
    """
    o_ref[...] = (jnp.dot(x_ref[...], w_ref[...],
                          preferred_element_type=jnp.float32)
                  + b_ref[...]).astype(o_ref.dtype)


def _round_up(n, m):
    return ((n + m - 1) // m) * m


def fold_params(weight, bias):
    """Fold gather + shared Linear + overlap-add scatter + 1/contrib once.

    Call once per weight update (hoisted out of the per-call forward path).
    weight: (EMBEDDED_DIM, COMPRESSED_EMB_DIM), bias: (COMPRESSED_EMB_DIM,).
    Returns w_total (64, 32) and b_total (1, 32), both f32.
    """
    g3 = jnp.asarray(_G3)
    s3 = jnp.asarray(_S3)
    inv_c = jnp.asarray(_INV_CONTRIB)
    w_total = jnp.einsum("dik,km,imc->dc", g3, weight.astype(jnp.float32), s3) \
        * inv_c[None, :]
    b_total = (jnp.einsum("m,imc->c", bias.astype(jnp.float32), s3) * inv_c)[None, :]
    return w_total, b_total


def convolutional_linear_forward(x, w_total, b_total, use_pallas=None):
    """x: (B, INITIAL_DIM) f32; w_total/b_total from fold_params().

    use_pallas=None -> auto dispatch (XLA for small batches, Pallas otherwise).
    """
    assert x.ndim == 2 and x.shape[-1] == INITIAL_DIM, x.shape
    rows = x.shape[0]
    x = x.astype(jnp.float32)

    if use_pallas is None:
        use_pallas = rows >= SMALL_BATCH_FALLBACK
    if not use_pallas:
        # Small-batch fallback: single fused matmul, fusable with surrounding ops.
        return x @ w_total + b_total

    # ---- derive the tile count/size from the actual row count ---- #
    num_tiles = pl.cdiv(rows, MAX_TILE_ROWS)
    if rows >= MIN_ROWS_FOR_TC_SPLIT:
        num_tiles = max(num_tiles, 2)            # give both v7x TCs work
    if num_tiles > 1 and num_tiles % 2 == 1:
        num_tiles += 1                           # even, balanced grid for megacore
    tile_rows = _round_up(pl.cdiv(rows, num_tiles), 8)
    rows_pad = num_tiles * tile_rows             # padding bounded to <8 rows/tile

    x_pad = x if rows_pad == rows else jnp.pad(x, ((0, rows_pad - rows), (0, 0)))

    flops = 2 * rows_pad * INITIAL_DIM * COMPRESSED_DIM
    bytes_accessed = 4 * (rows_pad * (INITIAL_DIM + COMPRESSED_DIM)
                          + INITIAL_DIM * COMPRESSED_DIM + COMPRESSED_DIM)

    out = pl.pallas_call(
        conv_linear_kernel,
        out_shape=jax.ShapeDtypeStruct((rows_pad, COMPRESSED_DIM), jnp.float32),
        grid=(num_tiles,),
        in_specs=[
            pl.BlockSpec((tile_rows, INITIAL_DIM), lambda i: (i, 0)),
            pl.BlockSpec((INITIAL_DIM, COMPRESSED_DIM), lambda i: (0, 0)),  # resident
            pl.BlockSpec((1, COMPRESSED_DIM), lambda i: (0, 0)),            # resident
        ],
        out_specs=pl.BlockSpec((tile_rows, COMPRESSED_DIM), lambda i: (i, 0)),
        compiler_params=pltpu.CompilerParams(
            dimension_semantics=("parallel",),    # shards across v7x's 2 TCs
            vmem_limit_bytes=VMEM_LIMIT_BYTES),
        cost_estimate=pl.CostEstimate(flops=flops, transcendentals=0,
                                      bytes_accessed=bytes_accessed),
    )(x_pad, w_total, b_total)

    return out if rows_pad == rows else out[:rows]


# ------------------------------ pure-JAX reference ------------------------------- #
def reference_forward(x, weight, bias):
    segs = jnp.stack([x[:, int(s):int(s) + EMBEDDED_DIM] for s in SIGNAL_STARTS],
                     axis=1)                                           # (B, nSeg, ED)
    lat = jnp.einsum("bse,ec->bsc", segs, weight) + bias               # (B, nSeg, CE)
    recon = jnp.zeros((x.shape[0], COMPRESSED_DIM), jnp.float32)
    contrib = jnp.zeros((x.shape[0], COMPRESSED_DIM), jnp.float32)
    for i, s in enumerate(COMPRESSED_STARTS):
        s = int(s)
        recon = recon.at[:, s:s + COMPRESSED_EMB_DIM].add(lat[:, i, :])
        contrib = contrib.at[:, s:s + COMPRESSED_EMB_DIM].add(1.0)
    return recon / contrib


# -------------------------------------- main -------------------------------------- #
if __name__ == "__main__":
    key = jax.random.PRNGKey(0)
    kx, kw, kb = jax.random.split(key, 3)

    x = jax.random.normal(kx, (BATCH, INITIAL_DIM), dtype=jnp.float32)

    # Deterministic nn.Linear(EMBEDDED_DIM -> COMPRESSED_EMB_DIM)-style init
    # (signalEncodingModule is passed in by the caller in the PyTorch module).
    bound = 1.0 / np.sqrt(EMBEDDED_DIM)
    weight = jax.random.uniform(kw, (EMBEDDED_DIM, COMPRESSED_EMB_DIM),
                                minval=-bound, maxval=bound, dtype=jnp.float32)
    bias = jax.random.uniform(kb, (COMPRESSED_EMB_DIM,),
                              minval=-bound, maxval=bound, dtype=jnp.float32)

    # Fold once per weight update (hoisted out of the forward path).
    w_total, b_total = fold_params(weight, bias)

    ref = reference_forward(x, weight, bias)

    # Pallas path (forced; auto-dispatch would pick the XLA fallback at B=8).
    out = jax.block_until_ready(
        convolutional_linear_forward(x, w_total, b_total, use_pallas=True))
    assert out.shape == (BATCH, COMPRESSED_DIM)
    np.testing.assert_allclose(np.asarray(out), np.asarray(ref), rtol=1e-5, atol=1e-5)

    # Pallas path with a batch that is not a multiple of 8 (exercises pad/slice).
    x2 = jax.random.normal(kx, (13, INITIAL_DIM), dtype=jnp.float32)
    out2 = jax.block_until_ready(
        convolutional_linear_forward(x2, w_total, b_total, use_pallas=True))
    np.testing.assert_allclose(np.asarray(out2),
                               np.asarray(reference_forward(x2, weight, bias)),
                               rtol=1e-5, atol=1e-5)

    # Auto-dispatch (small-batch XLA fallback) must match too.
    out3 = jax.block_until_ready(convolutional_linear_forward(x, w_total, b_total))
    np.testing.assert_allclose(np.asarray(out3), np.asarray(ref), rtol=1e-5, atol=1e-5)

    print("KERNEL_OK")
</pallas_src>

<mosaic_0001>
module attributes {stable_mosaic.version = 11 : i64} {
  func.func @conv_linear_kernel(%arg0: i32, %arg1: memref<8x64xf32, #tpu.memory_space<vmem>>, %arg2: memref<64x32xf32, #tpu.memory_space<vmem>>, %arg3: memref<1x32xf32, #tpu.memory_space<vmem>>, %arg4: memref<8x32xf32, #tpu.memory_space<vmem>>) attributes {dimension_semantics = [#tpu.dimension_semantics<parallel>], iteration_bounds = array<i64: 1>, scalar_prefetch = 0 : i64, scratch_operands = 0 : i64, tpu.core_type = #tpu.core_type<tc>, window_params = [{transform_indices = @transform_0, window_bounds = array<i64: 8, 64>}, {pipeline_mode = #tpu.pipeline_mode<synchronous>, transform_indices = @transform_1, window_bounds = array<i64: 64, 32>}, {pipeline_mode = #tpu.pipeline_mode<synchronous>, transform_indices = @transform_2, window_bounds = array<i64: 1, 32>}, {transform_indices = @transform_3, window_bounds = array<i64: 8, 32>}]} {
    %c0 = arith.constant 0 : index
    %c0_0 = arith.constant 0 : index
    %0 = vector.load %arg1[%c0, %c0_0] : memref<8x64xf32, #tpu.memory_space<vmem>>, vector<8x64xf32>
    %c0_1 = arith.constant 0 : index
    %c0_2 = arith.constant 0 : index
    %1 = vector.load %arg2[%c0_1, %c0_2] : memref<64x32xf32, #tpu.memory_space<vmem>>, vector<64x32xf32>
    %cst = arith.constant dense<0.000000e+00> : vector<8x32xf32>
    %2 = tpu.matmul %0, %1, %cst {dimension_numbers = #tpu.dot_dimension_numbers<[1], [0], [0], [1], [0, 0, 1, 1], [], []>} : vector<8x64xf32>, vector<64x32xf32>, vector<8x32xf32> -> vector<8x32xf32>
    %c0_3 = arith.constant 0 : index
    %c0_4 = arith.constant 0 : index
    %3 = vector.load %arg3[%c0_3, %c0_4] : memref<1x32xf32, #tpu.memory_space<vmem>>, vector<1x32xf32>
    %4 = vector.broadcast %3 : vector<1x32xf32> to vector<8x32xf32>
    %5 = arith.addf %2, %4 : vector<8x32xf32>
    %c0_5 = arith.constant 0 : index
    %c0_6 = arith.constant 0 : index
    %6 = vector.load %arg4[%c0_5, %c0_6] : memref<8x32xf32, #tpu.memory_space<vmem>>, vector<8x32xf32>
    tpu.vector_store %arg4[%c0_5, %c0_6], %5 {strides = array<i32>} : memref<8x32xf32, #tpu.memory_space<vmem>>, vector<8x32xf32>,
    return
  }
  func.func @transform_0(%arg0: i32) -> (i32, i32) {
    %c0_i32 = arith.constant 0 : i32
    %c0_i32_0 = arith.constant 0 : i32
    return %arg0, %c0_i32 : i32, i32
  }
  func.func @transform_1(%arg0: i32) -> (i32, i32) {
    %c0_i32 = arith.constant 0 : i32
    %c0_i32_0 = arith.constant 0 : i32
    %c0_i32_1 = arith.constant 0 : i32
    return %c0_i32, %c0_i32_0 : i32, i32
  }
  func.func @transform_2(%arg0: i32) -> (i32, i32) {
    %c0_i32 = arith.constant 0 : i32
    %c0_i32_0 = arith.constant 0 : i32
    %c0_i32_1 = arith.constant 0 : i32
    return %c0_i32, %c0_i32_0 : i32, i32
  }
  func.func @transform_3(%arg0: i32) -> (i32, i32) {
    %c0_i32 = arith.constant 0 : i32
    %c0_i32_0 = arith.constant 0 : i32
    return %arg0, %c0_i32 : i32, i32
  }
}

</mosaic_0001>

<llo_original>
// kernel: tpu_custom_call.1
$region0: #{tpu_custom_call.1}
  #allocation0 [shape = 'u32[]', space=smem, size = 0x4, offset = 0x4, fixed_abs, tag = 'smem constant byte address 0x4 - core index']
  #allocation1 [shape = 'u32[144,128]{1,0:T(1,128)}', space=vmem, size = 0x12000, scoped, tag = 'internal scratch']
  %s0 = inlined_call_operand.vmem [shape: f32[8,64], index: 0, kind: input, shape index: {}]
  %s1 = inlined_call_operand.vmem [shape: f32[64,32], index: 1, kind: input, shape index: {}]
  %s2 = inlined_call_operand.vmem [shape: f32[1,32], index: 2, kind: input, shape index: {}]
  %s3 = inlined_call_operand.hbm [shape: f32[8,32], index: 3, kind: output, shape index: {}]
  %s4 = sld [smem:[#allocation0]]
  $region22: #{tpu_custom_call.1} parent=0
    _
  %s6 = ssub.s32 1, %s4
  %s7 = scalar_select 0, %s6, %s4
  $region1: #{tpu_custom_call.1} parent=0
    #allocation2 [shape = 'u8[4096]{0}', space=vmem, size = 0x1000, scoped, tag = 'output window, operand 0, single buffered']
    #allocation3 [shape = 's32[1]{0}', space=sflag, size = 0x4, scoped, tag = 'scoped memory for tpu_custom_call.1']
    %8 = vsyncpa [#allocation3], 0
    // Predicated region
    $region2: #{tpu_custom_call.1} parent=1 // pred_check
      _
    $region3: #{tpu_custom_call.1} parent=1 // pred_check_branch
      %10 = sbr.rel (0) target = $region5
    $region4: #{tpu_custom_call.1} parent=1 // pred_region
      _
    $region5: #{tpu_custom_call.1} parent=1 // pred_fallthru
      _
    // Predicated region
    $region6: #{tpu_custom_call.1} parent=1 // pred_check
      _
    $region7: #{tpu_custom_call.1} parent=1 // pred_check_branch
      %12 = sbr.rel (0) target = $region9
    $region8: #{tpu_custom_call.1} parent=1 // pred_region
      _
    $region9: #{tpu_custom_call.1} parent=1 // pred_fallthru
      _
    // Predicated region
    $region10: #{tpu_custom_call.1} parent=1 // pred_check
      _
    $region11: #{tpu_custom_call.1} parent=1 // pred_check_branch
      %14 = sbr.rel (0) target = $region13
    $region12: #{tpu_custom_call.1} parent=1 // pred_region
      _
    $region13: #{tpu_custom_call.1} parent=1 // pred_fallthru
      _
    %v15 = vld [vmem:[%s0] sm:$0xff]
    %v16 = vld [vmem:[%s1] sm:$0xff]
    %v17 = vld [vmem:[%s1 + $0x8] sm:$0xff]
    %v18 = vld [vmem:[%s1 + $0x10] sm:$0xff]
    %v19 = vld [vmem:[%s1 + $0x18] sm:$0xff]
    %v20 = vld [vmem:[%s1 + $0x20] sm:$0xff]
    %v21 = vld [vmem:[%s1 + $0x28] sm:$0xff]
    %v22 = vld [vmem:[%s1 + $0x30] sm:$0xff]
    %v23 = vld [vmem:[%s1 + $0x38] sm:$0xff]
    %v24 = vld [vmem:[%s2] sm:$0x1]
    %v26 = vlaneseq
    %v27 = vshrl.u32 %v26, 7
    %v28 = vsub.s32 0, %v27
    %v29 = vrot.slane %v24, %v28
    %vm31 = vcmask 523264
    %v33 = vsel %vm31, %v15, 0
    %35 = vmatprep.subr.mxu0 0.0
    %36 = vmatpush1.msra.mxu0 %v16
    %37 = vmatprep.subr.mxu0 0.0
    %38 = vmatpush1.msra.mxu0 %v17
    %39 = vmatprep.subr.mxu0 0.0
    %40 = vmatpush1.msra.mxu0 %v18
    %41 = vmatprep.subr.mxu0 0.0
    %42 = vmatpush1.msra.mxu0 %v19
    %43 = vmatprep.subr.mxu0 0.0
    %44 = vmatpush1.msra.mxu0 %v20
    %45 = vmatprep.subr.mxu0 0.0
    %46 = vmatpush1.msra.mxu0 %v21
    %47 = vmatprep.subr.mxu0 0.0
    %48 = vmatpush1.msra.mxu0 %v22
    %49 = vmatprep.subr.mxu0 0.0
    %50 = vmatpush1.msra.mxu0 %v23
    %51 = vmatprep.subr.mxu0 0.0
    %52 = vmatpush1.msra.mxu0 0.0
    %53 = vmatprep.subr.mxu0 0.0
    %54 = vmatpush1.msra.mxu0 0.0
    %55 = vmatprep.subr.mxu0 0.0
    %56 = vmatpush1.msra.mxu0 0.0
    %57 = vmatprep.subr.mxu0 0.0
    %58 = vmatpush1.msra.mxu0 0.0
    %59 = vmatprep.subr.mxu0 0.0
    %60 = vmatpush1.msra.mxu0 0.0
    %61 = vmatprep.subr.mxu0 0.0
    %62 = vmatpush1.msra.mxu0 0.0
    %63 = vmatprep.subr.mxu0 0.0
    %64 = vmatpush1.msra.mxu0 0.0
    %65 = vmatprep.subr.mxu0 0.0
    %66 = vmatpush1.msra.mxu0 0.0
    %67 = vmatprep.subr.mxu0 0.0
    %68 = vmatpush1.msra.mxu0 0.0
    %69 = vmatprep.subr.mxu0 0.0
    %70 = vmatpush1.msra.mxu0 0.0
    %71 = vmatprep.subr.mxu0 0.0
    %72 = vmatpush1.msra.mxu0 0.0
    %73 = vmatprep.subr.mxu0 0.0
    %74 = vmatpush1.msra.mxu0 0.0
    %75 = vmatprep.subr.mxu0 0.0
    %76 = vmatpush1.msra.mxu0 0.0
    %77 = vmatprep.subr.mxu0 0.0
    %78 = vmatpush1.msra.mxu0 0.0
    %79 = vmatprep.subr.mxu0 0.0
    %80 = vmatpush1.msra.mxu0 0.0
    %81 = vmatprep.subr.mxu0 0.0
    %82 = vmatpush1.msra.mxu0 0.0
    %83 = vmatprep.subr.mxu0 0.0
    %84 = vmatpush1.msra.mxu0 0.0
    %85 = vmatprep.subr.mxu0 0.0
    %86 = vmatpush1.msra.mxu0 0.0
    %87 = vmatprep.subr.mxu0 0.0
    %88 = vmatpush1.msra.mxu0 0.0
    %89 = vmatprep.subr.mxu0 0.0
    %90 = vmatpush1.msra.mxu0 0.0
    %91 = vmatprep.subr.mxu0 0.0
    %92 = vmatpush1.msra.mxu0 0.0
    %93 = vmatprep.subr.mxu0 0.0
    %94 = vmatpush1.msra.mxu0 0.0
    %95 = vmatprep.subr.mxu0 0.0
    %96 = vmatpush1.msra.mxu0 0.0
    %97 = vmatprep.subr.mxu0 0.0
    %98 = vmatpush1.msra.mxu0 0.0
    %99 = vmatprep.mubr.f32.mxu0 0.0
    %100 = vmatmul.mubr.f32.gmra.mrb[0].mxu0 %v33
    %v101 = vpop.f32.mrb[0].mxu0
    %v102 = vadd.f32 %v29, %v101
    %v103 = vpop.f32.mrb[0].mxu0
    %104 = vdwg.mxu0
    %vm105 = vcmask 261120
    %106 = vst.msk [vmem:[#allocation2] sm:$0xff] %vm105, %v102
    // Predicated region
    $region14: #{tpu_custom_call.1} parent=1 // pred_check
      _
    $region15: #{tpu_custom_call.1} parent=1 // pred_check_branch
      %108 = sbr.rel (0) target = $region17
    $region16: #{tpu_custom_call.1} parent=1 // pred_region
      %s110 = ssub.s32 128, 128
      %111 = vsyncadd [#allocation3], %s110
      %s113 = sshll.u32 [#allocation2], 4
      %s114 = int_to_ptr.vmem [resolvable:$true] %s113
      %116 = dma.vmem_to_hbm [thread:$0]  %s114, 128, %s3, [#allocation3]
    $region17: #{tpu_custom_call.1} parent=1 // pred_fallthru
      _
    // Predicated region
    $region18: #{tpu_custom_call.1} parent=1 // pred_check
      _
    $region19: #{tpu_custom_call.1} parent=1 // pred_check_branch
      %118 = sbr.rel (0) target = $region21
    $region20: #{tpu_custom_call.1} parent=1 // pred_region
      %119 = dma.done [#allocation3], 128
    $region21: #{tpu_custom_call.1} parent=1 // pred_fallthru
      _
    %120 = vsyncpa [#allocation3], 1

</llo_original>
